<compile_context>
chip_gen: v7x
topology: tpu7x:2x2x1
jax: 0.10.0
libtpu: 0.0.40
codegen_flags: <defaults>
</compile_context>

<pallas_src>
import functools
import math

import jax
import jax.numpy as jnp
from jax.experimental import pallas as pl
from jax.experimental.pallas import tpu as pltpu


# ------------------------------- kernels -------------------------------
def _posenc_kernel(x_ref, pe_ref, o_ref):
    # x_ref: (B, ts, D); pe_ref: (ts, D) broadcast over the leading batch dim.
    o_ref[...] = x_ref[...] + pe_ref[...][None, :, :]


def _posenc_dropout_kernel(x_ref, pe_ref, bits_ref, o_ref, *, threshold, scale):
    # Fused (x + pe) and inverted dropout; bits_ref is a uint32 stream.
    y = x_ref[...] + pe_ref[...][None, :, :]
    keep = bits_ref[...] >= jnp.uint32(threshold)        # P(keep) = 1 - p
    o_ref[...] = jnp.where(keep, y * scale, jnp.zeros_like(y))


# ------------------------------- helpers --------------------------------
def make_positional_encoding(max_len, d_model, dtype=jnp.float32):
    """Same buffer as the PyTorch module: shape (max_len, 1, d_model)."""
    position = jnp.arange(max_len, dtype=jnp.float32)[:, None]           # (L, 1)
    div_term = jnp.exp(jnp.arange(0, d_model, 2, dtype=jnp.float32)
                       * (-math.log(10000.0) / d_model))                 # (D/2,)
    pe = jnp.zeros((max_len, d_model), jnp.float32)
    pe = pe.at[:, 0::2].set(jnp.sin(position * div_term))
    pe = pe.at[:, 1::2].set(jnp.cos(position * div_term))
    return pe[:, None, :].astype(dtype)        # == pe.unsqueeze(0).transpose(0,1)


def _choose_seq_tile(seq_len, bytes_per_row, itemsize, target_bytes=4 << 20):
    """Largest seq tile (multiple of the sublane quantum) whose x-block stays
    near target_bytes: big enough to amortize the ~0.35 us per-grid-step
    overhead, small enough that the double-buffered footprint fits every
    TPU generation's VMEM."""
    sub = max(8, 32 // itemsize)               # 8 rows f32, 16 bf16, 32 int8
    ts = (target_bytes // max(bytes_per_row, 1)) // sub * sub
    ts = max(sub, ts)
    return min(ts, seq_len)                    # full-dim block is always legal


# -------------------------------- wrapper --------------------------------
def positional_encoding_forward(x, pe, key=None, *, p=0.1, training=True):
    """x: (seq, batch, d_model), exactly like the PyTorch module."""
    S, B, D = x.shape
    dtype = x.dtype
    itemsize = jnp.dtype(dtype).itemsize

    use_dropout = training and p > 0.0
    if use_dropout and p >= 1.0:
        return jnp.zeros_like(x)
    if use_dropout and key is None:
        raise ValueError("dropout in training mode requires a PRNG key")

    pe_s = pe[:S, 0, :].astype(dtype)          # (S, D) — static slice of the buffer

    # Batch-major so block minor dims are (seq_tile, d_model): sublane-dense
    # rows, lane-dense stores whenever d_model is a multiple of 128.
    x_t = jnp.transpose(x, (1, 0, 2))          # (B, S, D)

    ts = _choose_seq_tile(S, B * D * itemsize, itemsize)
    grid = (pl.cdiv(S, ts),)                   # ragged last tile handled by Pallas

    x_spec = pl.BlockSpec((B, ts, D), lambda i: (0, i, 0))
    pe_spec = pl.BlockSpec((ts, D), lambda i: (i, 0))

    # Explicit VMEM budget from the actual double-buffered footprint.
    x_tile = B * ts * D * itemsize
    pe_tile = ts * D * itemsize
    bits_tile = B * ts * D * 4 if use_dropout else 0
    step_bytes = 2 * x_tile + pe_tile + bits_tile          # in + out + pe (+ bits)
    vmem_limit = int(min(64 << 20, max(32 << 20, 2 * step_bytes + (4 << 20))))

    compiler_params = pltpu.CompilerParams(
        dimension_semantics=("parallel",),     # tiles independent -> megacore-shardable
        vmem_limit_bytes=vmem_limit,
    )
    out_shape = jax.ShapeDtypeStruct((B, S, D), dtype)

    if use_dropout:
        # TODO(synk): the mask stream comes from jax.random (same distribution,
        # different stream than torch.nn.Dropout); the in-kernel HW PRNG was
        # dropped because pltpu.prng_* has no CPU/interpret lowering.
        bits = jax.random.bits(key, (B, S, D), dtype=jnp.uint32)
        threshold = int(round(p * (1 << 32)))               # P(bits < thr) = p
        kernel = functools.partial(_posenc_dropout_kernel,
                                   threshold=threshold, scale=1.0 / (1.0 - p))
        y_t = pl.pallas_call(
            kernel,
            out_shape=out_shape,
            grid=grid,
            in_specs=[x_spec, pe_spec,
                      pl.BlockSpec((B, ts, D), lambda i: (0, i, 0))],
            out_specs=x_spec,
            input_output_aliases={0: 0},       # x tile region == out tile region
            compiler_params=compiler_params,
        )(x_t, pe_s, bits)
    else:
        y_t = pl.pallas_call(
            _posenc_kernel,
            out_shape=out_shape,
            grid=grid,
            in_specs=[x_spec, pe_spec],
            out_specs=x_spec,
            input_output_aliases={0: 0},
            compiler_params=compiler_params,
        )(x_t, pe_s)

    return jnp.transpose(y_t, (1, 0, 2))       # back to (seq, batch, d_model)


# --------------------------- demo / self-check ---------------------------
if __name__ == "__main__":
    SEQ, BATCH, D_MODEL = 8, 2, 32
    P_DROP = 0.1

    root = jax.random.PRNGKey(0)
    key_x, key_drop = jax.random.split(root)
    x = jax.random.normal(key_x, (SEQ, BATCH, D_MODEL), dtype=jnp.float32)
    pe = make_positional_encoding(max_len=5000, d_model=D_MODEL)

    # eval mode: dropout is identity -> must match the pure-JAX reference
    y_eval = jax.block_until_ready(
        positional_encoding_forward(x, pe, p=P_DROP, training=False))
    ref = x + pe[:SEQ]
    assert y_eval.shape == (SEQ, BATCH, D_MODEL) and y_eval.dtype == jnp.float32
    assert jnp.allclose(y_eval, ref, atol=1e-6, rtol=1e-6)

    # train mode: every element is either 0 or (x + pe) / (1 - p)
    y_train = jax.block_until_ready(
        positional_encoding_forward(x, pe, key_drop, p=P_DROP, training=True))
    scaled = ref * (1.0 / (1.0 - P_DROP))
    ok = jnp.logical_or(jnp.isclose(y_train, 0.0, atol=1e-6),
                        jnp.isclose(y_train, scaled, atol=1e-5, rtol=1e-5))
    assert y_train.shape == (SEQ, BATCH, D_MODEL) and bool(jnp.all(ok))

    print("KERNEL_OK")
</pallas_src>

<mosaic_0001>
module attributes {stable_mosaic.version = 11 : i64} {
  func.func @_posenc_kernel(%arg0: i32, %arg1: memref<2x8x32xf32, #tpu.memory_space<vmem>>, %arg2: memref<8x32xf32, #tpu.memory_space<vmem>>, %arg3: memref<2x8x32xf32, #tpu.memory_space<vmem>>) attributes {dimension_semantics = [#tpu.dimension_semantics<parallel>], iteration_bounds = array<i64: 1>, scalar_prefetch = 0 : i64, scratch_operands = 0 : i64, tpu.core_type = #tpu.core_type<tc>, window_params = [{transform_indices = @transform_0, window_bounds = array<i64: 2, 8, 32>}, {transform_indices = @transform_1, window_bounds = array<i64: 8, 32>}, {transform_indices = @transform_2, window_bounds = array<i64: 2, 8, 32>}]} {
    %c0 = arith.constant 0 : index
    %c0_0 = arith.constant 0 : index
    %c0_1 = arith.constant 0 : index
    %0 = vector.load %arg1[%c0, %c0_0, %c0_1] : memref<2x8x32xf32, #tpu.memory_space<vmem>>, vector<2x8x32xf32>
    %c0_2 = arith.constant 0 : index
    %c0_3 = arith.constant 0 : index
    %1 = vector.load %arg2[%c0_2, %c0_3] : memref<8x32xf32, #tpu.memory_space<vmem>>, vector<8x32xf32>
    %2 = vector.shape_cast %1 : vector<8x32xf32> to vector<1x8x32xf32>
    %3 = vector.broadcast %2 : vector<1x8x32xf32> to vector<2x8x32xf32>
    %4 = arith.addf %0, %3 : vector<2x8x32xf32>
    %c0_4 = arith.constant 0 : index
    %c0_5 = arith.constant 0 : index
    %c0_6 = arith.constant 0 : index
    %5 = vector.load %arg3[%c0_4, %c0_5, %c0_6] : memref<2x8x32xf32, #tpu.memory_space<vmem>>, vector<2x8x32xf32>
    tpu.vector_store %arg3[%c0_4, %c0_5, %c0_6], %4 {strides = array<i32>} : memref<2x8x32xf32, #tpu.memory_space<vmem>>, vector<2x8x32xf32>,
    return
  }
  func.func @transform_0(%arg0: i32) -> (i32, i32, i32) {
    %c0_i32 = arith.constant 0 : i32
    %c0_i32_0 = arith.constant 0 : i32
    %c0_i32_1 = arith.constant 0 : i32
    return %c0_i32, %arg0, %c0_i32_0 : i32, i32, i32
  }
  func.func @transform_1(%arg0: i32) -> (i32, i32) {
    %c0_i32 = arith.constant 0 : i32
    %c0_i32_0 = arith.constant 0 : i32
    return %arg0, %c0_i32 : i32, i32
  }
  func.func @transform_2(%arg0: i32) -> (i32, i32, i32) {
    %c0_i32 = arith.constant 0 : i32
    %c0_i32_0 = arith.constant 0 : i32
    %c0_i32_1 = arith.constant 0 : i32
    return %c0_i32, %arg0, %c0_i32_0 : i32, i32, i32
  }
}

</mosaic_0001>

<llo_original>
// kernel: tpu_custom_call.1
$region0: #{tpu_custom_call.1}
  #allocation0 [shape = 'u32[]', space=smem, size = 0x4, offset = 0x4, fixed_abs, tag = 'smem constant byte address 0x4 - core index']
  #allocation1 [shape = 'u32[144,128]{1,0:T(1,128)}', space=vmem, size = 0x12000, scoped, tag = 'internal scratch']
  %s0 = inlined_call_operand.hbm [shape: f32[2,8,32], index: 0, kind: input, shape index: {}, may-alias: {0,2}]
  %s1 = inlined_call_operand.vmem [shape: f32[8,32], index: 1, kind: input, shape index: {}]
  %s2 = inlined_call_operand.hbm [shape: f32[2,8,32], index: 2, kind: output, shape index: {}, may-alias: {0,2}]
  %s3 = sld [smem:[#allocation0]]
  $region22: #{tpu_custom_call.1} parent=0
    _
  %s5 = ssub.s32 1, %s3
  %s6 = scalar_select 0, %s5, %s3
  $region1: #{tpu_custom_call.1} parent=0
    #allocation2 [shape = 'u8[8192]{0}', space=vmem, size = 0x2000, scoped, tag = 'input window, operand 0, single buffered']
    #allocation3 [shape = 's32[1]{0}', space=sflag, size = 0x4, scoped, tag = 'scoped memory for tpu_custom_call.1']
    #allocation4 [shape = 's32[1]{0}', space=sflag, size = 0x4, scoped, tag = 'scoped memory for tpu_custom_call.1']
    #allocation5 [shape = 'u8[8192]{0}', space=vmem, size = 0x2000, scoped, tag = 'output window, operand 0, single buffered']
    %7 = vsyncpa [#allocation3], 0
    %8 = vsyncpa [#allocation4], 0
    // Predicated region
    $region2: #{tpu_custom_call.1} parent=1 // pred_check
      _
    $region3: #{tpu_custom_call.1} parent=1 // pred_check_branch
      %10 = sbr.rel (0) target = $region5
    $region4: #{tpu_custom_call.1} parent=1 // pred_region
      %s12 = ssub.s32 256, 256
      %13 = vsyncadd [#allocation3], %s12
      %s14 = sshll.u32 [#allocation2], 4
      %s15 = int_to_ptr.vmem [resolvable:$true] %s14
      %20 = dma.hbm_to_vmem [thread:$0]  %s0, 256, %s15, [#allocation3], 128, 128, 8
    $region5: #{tpu_custom_call.1} parent=1 // pred_fallthru
      _
    // Predicated region
    $region6: #{tpu_custom_call.1} parent=1 // pred_check
      _
    $region7: #{tpu_custom_call.1} parent=1 // pred_check_branch
      %22 = sbr.rel (0) target = $region9
    $region8: #{tpu_custom_call.1} parent=1 // pred_region
      _
    $region9: #{tpu_custom_call.1} parent=1 // pred_fallthru
      _
    // Predicated region
    $region10: #{tpu_custom_call.1} parent=1 // pred_check
      _
    $region11: #{tpu_custom_call.1} parent=1 // pred_check_branch
      %24 = sbr.rel (0) target = $region13
    $region12: #{tpu_custom_call.1} parent=1 // pred_region
      %25 = dma.done [#allocation3], 256
    $region13: #{tpu_custom_call.1} parent=1 // pred_fallthru
      _
    %v26 = vld [vmem:[#allocation2] sm:$0xff]
    %v27 = vld [vmem:[#allocation2 + $0x8] sm:$0xff]
    %v28 = vld [vmem:[%s1] sm:$0xff]
    %v29 = vadd.f32 %v26, %v28
    %v30 = vadd.f32 %v27, %v28
    %vm31 = vcmask 261120
    %32 = vst.msk [vmem:[#allocation5] sm:$0xff] %vm31, %v29
    %33 = vst.msk [vmem:[#allocation5 + $0x8] sm:$0xff] %vm31, %v30
    // Predicated region
    $region14: #{tpu_custom_call.1} parent=1 // pred_check
      _
    $region15: #{tpu_custom_call.1} parent=1 // pred_check_branch
      %35 = sbr.rel (0) target = $region17
    $region16: #{tpu_custom_call.1} parent=1 // pred_region
      %s37 = ssub.s32 256, 256
      %38 = vsyncadd [#allocation4], %s37
      %s39 = sshll.u32 [#allocation5], 4
      %s40 = int_to_ptr.vmem [resolvable:$true] %s39
      %45 = dma.vmem_to_hbm [thread:$0]  %s40, 256, %s2, [#allocation4], 128, 128, 8
    $region17: #{tpu_custom_call.1} parent=1 // pred_fallthru
      _
    // Predicated region
    $region18: #{tpu_custom_call.1} parent=1 // pred_check
      _
    $region19: #{tpu_custom_call.1} parent=1 // pred_check_branch
      %47 = sbr.rel (0) target = $region21
    $region20: #{tpu_custom_call.1} parent=1 // pred_region
      %48 = dma.done [#allocation4], 256
    $region21: #{tpu_custom_call.1} parent=1 // pred_fallthru
      _
    %49 = vsyncpa [#allocation3], 1
    %50 = vsyncpa [#allocation4], 1

</llo_original>
